<compile_context>
chip_gen: v5e
topology: v5e:2x2
jax: 0.10.0
libtpu: 0.0.40
codegen_flags: <defaults>
</compile_context>

<pallas_src>
import functools

import jax
import jax.numpy as jnp
from jax import lax
from jax.experimental import pallas as pl
from jax.experimental.pallas import tpu as pltpu

LANE = 128   # lane width (last-dim / source padding)
SUB = 16     # sublane rounding safe for both f32 (8) and bf16 (16) packing


def _round_up(x, m):
    return (x + m - 1) // m * m


# ---------------------------------------------------------------------------
# Fused kernel: proj + n_layers x WeightedSAGEConv + residual add
# ---------------------------------------------------------------------------
def _make_fused_kernel(n_layers, nd_pad, ns_pad, out_dst, out_dst_pad, hidden):
    """Ref order: [x, proj_w, proj_b,
                   (a, qw2, bq, w1, bw) * n_layers,
                   out_ref, h_scratch(bf16), hdst_scratch(f32)]."""

    def kernel(*refs):
        x_ref, pw_ref, pb_ref = refs[0], refs[1], refs[2]
        layer_refs = refs[3:3 + 5 * n_layers]
        o_ref = refs[3 + 5 * n_layers]
        h_ref = refs[3 + 5 * n_layers + 1]        # bf16 hidden state, VMEM-resident
        hdst_ref = refs[3 + 5 * n_layers + 2]     # f32 proj(dst) rows for residual

        # --- h_item = proj(blocks[0].srcdata)  (bf16 MXU, f32 accumulate) ------
        # x is zero-padded in rows and feature lanes; padded rows (= bias rows
        # after the projection) only ever meet zero adjacency weights.
        h_item = (
            jnp.dot(x_ref[...], pw_ref[...], preferred_element_type=jnp.float32)
            + pb_ref[...]
        )
        # proj(blocks[-1].dstdata) == first out_dst rows (dst-prefix convention);
        # park it in VMEM so it does not hold vregs across the layer loop.
        hdst_ref[...] = h_item[0:out_dst_pad, :]
        h_ref[...] = h_item.astype(jnp.bfloat16)

        # --- n_layers x WeightedSAGEConv ----------------------------------------
        for l in range(n_layers):
            a_ref, qw2_ref, bq_ref, w1_ref, bw_ref = layer_refs[5 * l:5 * l + 5]
            ndp, nsp = nd_pad[l], ns_pad[l]

            # Fused N-axis matmul with qw2 = [Q ; W2] (H x 2H): fills the 256-lane
            # MXU and yields both relu(h@Q+bq) and h@W2 without a lane concat.
            h_src = h_ref[0:nsp, :]                          # per-layer src padding
            tmp = jnp.dot(h_src, qw2_ref[...],
                          preferred_element_type=jnp.float32)      # [nsp, 2H] f32
            n_src = jnp.maximum(tmp[:, 0:hidden] + bq_ref[...], 0.0)

            a = a_ref[...]                                          # bf16 [ndp, nsp]
            agg = jnp.dot(a, n_src.astype(jnp.bfloat16),
                          preferred_element_type=jnp.float32)       # [ndp, H]
            # edge-weight sums in f32 (bf16 accumulation would drift), clamp >= 1
            ws = jnp.maximum(
                jnp.sum(a.astype(jnp.float32), axis=1, keepdims=True), 1.0)
            inv_ws = pl.reciprocal(ws, approx=True)                 # EUP, not VPU

            hw2_dst = tmp[0:ndp, hidden:2 * hidden]                 # h_dst @ W2
            z = (jnp.dot((agg * inv_ws).astype(jnp.bfloat16), w1_ref[...],
                         preferred_element_type=jnp.float32)
                 + hw2_dst + bw_ref[...])
            z = jnp.maximum(z, 0.0)

            # row-wise L2 normalize with zero-norm guard (rsqrt on the EUP)
            sumsq = jnp.sum(z * z, axis=1, keepdims=True)
            z = z * jnp.where(sumsq == 0.0, 1.0, lax.rsqrt(sumsq))

            if l < n_layers - 1:
                h_ref[0:ndp, :] = z.astype(jnp.bfloat16)   # resident for next layer
            else:
                # out = h_item_dst + sage(blocks, h_item)
                o_ref[...] = z[0:out_dst, :] + hdst_ref[0:out_dst, :]

    return kernel


# ---------------------------------------------------------------------------
# Wrapper
# ---------------------------------------------------------------------------
@functools.partial(jax.jit, static_argnames=("num_dst",))
def pinsage_forward(params, x_feat, adjs, num_dst):
    """Forward pass of PinSAGEModel.

    x_feat : [N_src0, F_in] raw features of all src nodes of blocks[0]
             (DGL convention: dst nodes of every block are a prefix of its src
              nodes, so blocks[-1].dstdata features == x_feat[:num_dst[-1]]).
    adjs   : list of dense weighted adjacencies, adjs[l] is [N_dst_l, N_src_l].
    """
    n_layers = len(adjs)
    f_in, hidden = params["proj_w"].shape
    out_dst = num_dst[-1]
    num_src = [a.shape[1] for a in adjs]

    assert x_feat.shape[0] == num_src[0]
    for l in range(n_layers):
        assert num_dst[l] <= num_src[l]
        if l + 1 < n_layers:
            assert num_src[l + 1] == num_dst[l], "dst-prefix convention violated"

    ns_pad = tuple(_round_up(s, LANE) for s in num_src)   # per-layer src padding
    nd_pad = tuple(_round_up(d, SUB) for d in num_dst)    # sublane-aligned dst rows
    out_dst_pad = _round_up(out_dst, SUB)
    f_pad = _round_up(f_in, LANE)                         # lane-dense features

    # bf16 MXU operands (x, weights, adjacency); biases stay f32 (added post-acc).
    x_pad = jnp.pad(
        x_feat, ((0, ns_pad[0] - x_feat.shape[0]), (0, f_pad - f_in))
    ).astype(jnp.bfloat16)
    pw_pad = jnp.pad(params["proj_w"], ((0, f_pad - f_in), (0, 0))).astype(jnp.bfloat16)

    operands = [x_pad, pw_pad, params["proj_b"]]
    for l, (a, (wq, bq, w1, w2, bw)) in enumerate(zip(adjs, params["sage"])):
        a_pad = jnp.pad(a, ((0, nd_pad[l] - a.shape[0]),
                            (0, ns_pad[l] - a.shape[1]))).astype(jnp.bfloat16)
        qw2 = jnp.concatenate([wq, w2], axis=1).astype(jnp.bfloat16)    # [H, 2H]
        operands += [a_pad, qw2, bq, w1.astype(jnp.bfloat16), bw]

    kernel = _make_fused_kernel(n_layers, nd_pad, ns_pad, out_dst, out_dst_pad, hidden)
    vmem_spec = pl.BlockSpec(memory_space=pltpu.MemorySpace.VMEM)

    return pl.pallas_call(
        kernel,
        out_shape=jax.ShapeDtypeStruct((out_dst, hidden), jnp.float32),
        in_specs=[vmem_spec] * len(operands),
        out_specs=vmem_spec,
        scratch_shapes=[pltpu.VMEM((ns_pad[0], hidden), jnp.bfloat16),
                        pltpu.VMEM((out_dst_pad, hidden), jnp.float32)],
    )(*operands)


# ---------------------------------------------------------------------------
# Pure-JAX reference (exact f32, for correctness check)
# ---------------------------------------------------------------------------
def pinsage_reference(params, x_feat, adjs, num_dst):
    wp, bp = params["proj_w"], params["proj_b"]
    h = x_feat @ wp + bp
    h_item_dst = h[: num_dst[-1]]
    for (wq, bq, w1, w2, bw), a, nd in zip(params["sage"], adjs, num_dst):
        n = jax.nn.relu(h @ wq + bq)
        agg = a @ n
        ws = jnp.maximum(jnp.sum(a, axis=1, keepdims=True), 1.0)
        h_dst = h[:nd]
        z = jax.nn.relu((agg / ws) @ w1 + h_dst @ w2 + bw)
        norm = jnp.sqrt(jnp.sum(z * z, axis=1, keepdims=True))
        norm = jnp.where(norm == 0.0, 1.0, norm)
        h = z / norm
    return h_item_dst + h


# ---------------------------------------------------------------------------
# Deterministic parameter construction
# ---------------------------------------------------------------------------
def make_params(key, f_in, hidden, n_layers):
    keys = jax.random.split(key, 2 + 5 * n_layers)
    scale = 0.1
    params = {
        "proj_w": scale * jax.random.normal(keys[0], (f_in, hidden), jnp.float32),
        "proj_b": scale * jax.random.normal(keys[1], (1, hidden), jnp.float32),
        "sage": [],
    }
    for l in range(n_layers):
        k = keys[2 + 5 * l: 2 + 5 * (l + 1)]
        wq = scale * jax.random.normal(k[0], (hidden, hidden), jnp.float32)
        bq = scale * jax.random.normal(k[1], (1, hidden), jnp.float32)
        w1 = scale * jax.random.normal(k[2], (hidden, hidden), jnp.float32)
        w2 = scale * jax.random.normal(k[3], (hidden, hidden), jnp.float32)
        bw = scale * jax.random.normal(k[4], (1, hidden), jnp.float32)
        params["sage"].append((wq, bq, w1, w2, bw))
    return params


if __name__ == "__main__":
    key = jax.random.PRNGKey(0)
    F_IN = 32        # raw node feature dim
    HIDDEN = 128     # hidden_dims == output_dims
    N_LAYERS = 2
    NUM_SRC = [64, 32]   # src nodes per block
    NUM_DST = [32, 16]   # dst nodes per block (prefix of src)

    k_feat, k_par, k_a0, k_a1, k_m0, k_m1 = jax.random.split(key, 6)
    x_feat = jax.random.normal(k_feat, (NUM_SRC[0], F_IN), jnp.float32)

    # dense weighted block adjacencies (non-negative edge weights, zeros = no edge)
    a0 = jax.random.uniform(k_a0, (NUM_DST[0], NUM_SRC[0]), jnp.float32)
    a0 = a0 * (jax.random.uniform(k_m0, a0.shape) > 0.5).astype(jnp.float32)
    a1 = jax.random.uniform(k_a1, (NUM_DST[1], NUM_SRC[1]), jnp.float32)
    a1 = a1 * (jax.random.uniform(k_m1, a1.shape) > 0.5).astype(jnp.float32)
    adjs = [a0, a1]

    params = make_params(k_par, F_IN, HIDDEN, N_LAYERS)

    out = pinsage_forward(params, x_feat, adjs, num_dst=tuple(NUM_DST))
    out = jax.block_until_ready(out)
    assert out.shape == (NUM_DST[-1], HIDDEN) and out.dtype == jnp.float32
    assert bool(jnp.all(jnp.isfinite(out)))

    ref = pinsage_reference(params, x_feat, adjs, NUM_DST)
    # bf16 MXU operands + approx reciprocal/rsqrt -> ~1e-2-level differences vs
    # the exact-f32 reference; 2e-2 keeps the check meaningful with margin.
    assert bool(jnp.allclose(out, ref, rtol=2e-2, atol=2e-2))
    print("KERNEL_OK")
</pallas_src>

<mosaic_0001>
module attributes {stable_mosaic.version = 11 : i64} {
  func.func @kernel(%arg0: memref<128x128xbf16, #tpu.memory_space<vmem>>, %arg1: memref<128x128xbf16, #tpu.memory_space<vmem>>, %arg2: memref<1x128xf32, #tpu.memory_space<vmem>>, %arg3: memref<32x128xbf16, #tpu.memory_space<vmem>>, %arg4: memref<128x256xbf16, #tpu.memory_space<vmem>>, %arg5: memref<1x128xf32, #tpu.memory_space<vmem>>, %arg6: memref<128x128xbf16, #tpu.memory_space<vmem>>, %arg7: memref<1x128xf32, #tpu.memory_space<vmem>>, %arg8: memref<16x128xbf16, #tpu.memory_space<vmem>>, %arg9: memref<128x256xbf16, #tpu.memory_space<vmem>>, %arg10: memref<1x128xf32, #tpu.memory_space<vmem>>, %arg11: memref<128x128xbf16, #tpu.memory_space<vmem>>, %arg12: memref<1x128xf32, #tpu.memory_space<vmem>>, %arg13: memref<16x128xf32, #tpu.memory_space<vmem>>, %arg14: memref<128x128xbf16, #tpu.memory_space<vmem>>, %arg15: memref<16x128xf32, #tpu.memory_space<vmem>>) attributes {dimension_semantics = [], scalar_prefetch = 0 : i64, scratch_operands = 2 : i64, tpu.core_type = #tpu.core_type<tc>} {
    %c0 = arith.constant 0 : index
    %c0_0 = arith.constant 0 : index
    %0 = vector.load %arg0[%c0, %c0_0] : memref<128x128xbf16, #tpu.memory_space<vmem>>, vector<128x128xbf16>
    %c0_1 = arith.constant 0 : index
    %c0_2 = arith.constant 0 : index
    %1 = vector.load %arg1[%c0_1, %c0_2] : memref<128x128xbf16, #tpu.memory_space<vmem>>, vector<128x128xbf16>
    %cst = arith.constant dense<0.000000e+00> : vector<128x128xf32>
    %2 = tpu.matmul %0, %1, %cst {dimension_numbers = #tpu.dot_dimension_numbers<[1], [0], [0], [1], [0, 0, 1, 1], [], []>} : vector<128x128xbf16>, vector<128x128xbf16>, vector<128x128xf32> -> vector<128x128xf32>
    %c0_3 = arith.constant 0 : index
    %c0_4 = arith.constant 0 : index
    %3 = vector.load %arg2[%c0_3, %c0_4] : memref<1x128xf32, #tpu.memory_space<vmem>>, vector<1x128xf32>
    %4 = vector.broadcast %3 : vector<1x128xf32> to vector<128x128xf32>
    %5 = arith.addf %2, %4 : vector<128x128xf32>
    %6 = vector.extract_strided_slice %5 {offsets = [0, 0], sizes = [16, 128], strides = [1, 1]} : vector<128x128xf32> to vector<16x128xf32>
    %c0_5 = arith.constant 0 : index
    %c0_6 = arith.constant 0 : index
    %7 = vector.load %arg15[%c0_5, %c0_6] : memref<16x128xf32, #tpu.memory_space<vmem>>, vector<16x128xf32>
    tpu.vector_store %arg15[%c0_5, %c0_6], %6 {strides = array<i32>} : memref<16x128xf32, #tpu.memory_space<vmem>>, vector<16x128xf32>,
    %8 = arith.truncf %5 : vector<128x128xf32> to vector<128x128xbf16>
    %c0_7 = arith.constant 0 : index
    %c0_8 = arith.constant 0 : index
    %9 = vector.load %arg14[%c0_7, %c0_8] : memref<128x128xbf16, #tpu.memory_space<vmem>>, vector<128x128xbf16>
    tpu.vector_store %arg14[%c0_7, %c0_8], %8 {strides = array<i32>} : memref<128x128xbf16, #tpu.memory_space<vmem>>, vector<128x128xbf16>,
    %c0_9 = arith.constant 0 : index
    %c0_10 = arith.constant 0 : index
    %10 = vector.load %arg14[%c0_9, %c0_10] : memref<128x128xbf16, #tpu.memory_space<vmem>>, vector<128x128xbf16>
    %c0_11 = arith.constant 0 : index
    %c0_12 = arith.constant 0 : index
    %11 = vector.load %arg4[%c0_11, %c0_12] : memref<128x256xbf16, #tpu.memory_space<vmem>>, vector<128x256xbf16>
    %cst_13 = arith.constant dense<0.000000e+00> : vector<128x256xf32>
    %12 = tpu.matmul %10, %11, %cst_13 {dimension_numbers = #tpu.dot_dimension_numbers<[1], [0], [0], [1], [0, 0, 1, 1], [], []>} : vector<128x128xbf16>, vector<128x256xbf16>, vector<128x256xf32> -> vector<128x256xf32>
    %13 = vector.extract_strided_slice %12 {offsets = [0, 0], sizes = [128, 128], strides = [1, 1]} : vector<128x256xf32> to vector<128x128xf32>
    %c0_14 = arith.constant 0 : index
    %c0_15 = arith.constant 0 : index
    %14 = vector.load %arg5[%c0_14, %c0_15] : memref<1x128xf32, #tpu.memory_space<vmem>>, vector<1x128xf32>
    %15 = vector.broadcast %14 : vector<1x128xf32> to vector<128x128xf32>
    %16 = arith.addf %13, %15 : vector<128x128xf32>
    %cst_16 = arith.constant 0.000000e+00 : f32
    %17 = vector.broadcast %cst_16 : f32 to vector<128x128xf32>
    %18 = arith.maximumf %16, %17 : vector<128x128xf32>
    %c0_17 = arith.constant 0 : index
    %c0_18 = arith.constant 0 : index
    %19 = vector.load %arg3[%c0_17, %c0_18] : memref<32x128xbf16, #tpu.memory_space<vmem>>, vector<32x128xbf16>
    %20 = arith.truncf %18 : vector<128x128xf32> to vector<128x128xbf16>
    %cst_19 = arith.constant dense<0.000000e+00> : vector<32x128xf32>
    %21 = tpu.matmul %19, %20, %cst_19 {dimension_numbers = #tpu.dot_dimension_numbers<[1], [0], [0], [1], [0, 0, 1, 1], [], []>} : vector<32x128xbf16>, vector<128x128xbf16>, vector<32x128xf32> -> vector<32x128xf32>
    %22 = arith.extf %19 : vector<32x128xbf16> to vector<32x128xf32>
    %cst_20 = arith.constant dense<0.000000e+00> : vector<32xf32>
    %23 = vector.multi_reduction <add>, %22, %cst_20 [1] : vector<32x128xf32> to vector<32xf32>
    %24 = vector.shape_cast %23 : vector<32xf32> to vector<32x1xf32>
    %cst_21 = arith.constant 1.000000e+00 : f32
    %25 = vector.broadcast %cst_21 : f32 to vector<32x1xf32>
    %26 = arith.maximumf %24, %25 : vector<32x1xf32>
    %27 = tpu.reciprocal %26 {approx = true} : vector<32x1xf32> -> vector<32x1xf32>
    %28 = vector.extract_strided_slice %12 {offsets = [0, 128], sizes = [32, 128], strides = [1, 1]} : vector<128x256xf32> to vector<32x128xf32>
    %29 = vector.broadcast %27 : vector<32x1xf32> to vector<32x128xf32>
    %30 = arith.mulf %21, %29 : vector<32x128xf32>
    %31 = arith.truncf %30 : vector<32x128xf32> to vector<32x128xbf16>
    %c0_22 = arith.constant 0 : index
    %c0_23 = arith.constant 0 : index
    %32 = vector.load %arg6[%c0_22, %c0_23] : memref<128x128xbf16, #tpu.memory_space<vmem>>, vector<128x128xbf16>
    %cst_24 = arith.constant dense<0.000000e+00> : vector<32x128xf32>
    %33 = tpu.matmul %31, %32, %cst_24 {dimension_numbers = #tpu.dot_dimension_numbers<[1], [0], [0], [1], [0, 0, 1, 1], [], []>} : vector<32x128xbf16>, vector<128x128xbf16>, vector<32x128xf32> -> vector<32x128xf32>
    %34 = arith.addf %33, %28 : vector<32x128xf32>
    %c0_25 = arith.constant 0 : index
    %c0_26 = arith.constant 0 : index
    %35 = vector.load %arg7[%c0_25, %c0_26] : memref<1x128xf32, #tpu.memory_space<vmem>>, vector<1x128xf32>
    %36 = vector.broadcast %35 : vector<1x128xf32> to vector<32x128xf32>
    %37 = arith.addf %34, %36 : vector<32x128xf32>
    %cst_27 = arith.constant 0.000000e+00 : f32
    %38 = vector.broadcast %cst_27 : f32 to vector<32x128xf32>
    %39 = arith.maximumf %37, %38 : vector<32x128xf32>
    %40 = arith.mulf %39, %39 : vector<32x128xf32>
    %cst_28 = arith.constant dense<0.000000e+00> : vector<32xf32>
    %41 = vector.multi_reduction <add>, %40, %cst_28 [1] : vector<32x128xf32> to vector<32xf32>
    %42 = vector.shape_cast %41 : vector<32xf32> to vector<32x1xf32>
    %cst_29 = arith.constant 0.000000e+00 : f32
    %43 = vector.broadcast %cst_29 : f32 to vector<32x1xf32>
    %44 = arith.cmpf oeq, %42, %43 : vector<32x1xf32>
    %45 = math.rsqrt %42 : vector<32x1xf32>
    %cst_30 = arith.constant 1.000000e+00 : f32
    %46 = vector.broadcast %cst_30 : f32 to vector<32x1xf32>
    %47 = arith.select %44, %46, %45 : vector<32x1xi1>, vector<32x1xf32>
    %48 = vector.broadcast %47 : vector<32x1xf32> to vector<32x128xf32>
    %49 = arith.mulf %39, %48 : vector<32x128xf32>
    %50 = arith.truncf %49 : vector<32x128xf32> to vector<32x128xbf16>
    %c0_31 = arith.constant 0 : index
    %c0_32 = arith.constant 0 : index
    %51 = vector.load %arg14[%c0_31, %c0_32] : memref<128x128xbf16, #tpu.memory_space<vmem>>, vector<32x128xbf16>
    tpu.vector_store %arg14[%c0_31, %c0_32], %50 {strides = array<i32>} : memref<128x128xbf16, #tpu.memory_space<vmem>>, vector<32x128xbf16>,
    %c0_33 = arith.constant 0 : index
    %c0_34 = arith.constant 0 : index
    %52 = vector.load %arg14[%c0_33, %c0_34] : memref<128x128xbf16, #tpu.memory_space<vmem>>, vector<128x128xbf16>
    %c0_35 = arith.constant 0 : index
    %c0_36 = arith.constant 0 : index
    %53 = vector.load %arg9[%c0_35, %c0_36] : memref<128x256xbf16, #tpu.memory_space<vmem>>, vector<128x256xbf16>
    %cst_37 = arith.constant dense<0.000000e+00> : vector<128x256xf32>
    %54 = tpu.matmul %52, %53, %cst_37 {dimension_numbers = #tpu.dot_dimension_numbers<[1], [0], [0], [1], [0, 0, 1, 1], [], []>} : vector<128x128xbf16>, vector<128x256xbf16>, vector<128x256xf32> -> vector<128x256xf32>
    %55 = vector.extract_strided_slice %54 {offsets = [0, 0], sizes = [128, 128], strides = [1, 1]} : vector<128x256xf32> to vector<128x128xf32>
    %c0_38 = arith.constant 0 : index
    %c0_39 = arith.constant 0 : index
    %56 = vector.load %arg10[%c0_38, %c0_39] : memref<1x128xf32, #tpu.memory_space<vmem>>, vector<1x128xf32>
    %57 = vector.broadcast %56 : vector<1x128xf32> to vector<128x128xf32>
    %58 = arith.addf %55, %57 : vector<128x128xf32>
    %cst_40 = arith.constant 0.000000e+00 : f32
    %59 = vector.broadcast %cst_40 : f32 to vector<128x128xf32>
    %60 = arith.maximumf %58, %59 : vector<128x128xf32>
    %c0_41 = arith.constant 0 : index
    %c0_42 = arith.constant 0 : index
    %61 = vector.load %arg8[%c0_41, %c0_42] : memref<16x128xbf16, #tpu.memory_space<vmem>>, vector<16x128xbf16>
    %62 = arith.truncf %60 : vector<128x128xf32> to vector<128x128xbf16>
    %cst_43 = arith.constant dense<0.000000e+00> : vector<16x128xf32>
    %63 = tpu.matmul %61, %62, %cst_43 {dimension_numbers = #tpu.dot_dimension_numbers<[1], [0], [0], [1], [0, 0, 1, 1], [], []>} : vector<16x128xbf16>, vector<128x128xbf16>, vector<16x128xf32> -> vector<16x128xf32>
    %64 = arith.extf %61 : vector<16x128xbf16> to vector<16x128xf32>
    %cst_44 = arith.constant dense<0.000000e+00> : vector<16xf32>
    %65 = vector.multi_reduction <add>, %64, %cst_44 [1] : vector<16x128xf32> to vector<16xf32>
    %66 = vector.shape_cast %65 : vector<16xf32> to vector<16x1xf32>
    %cst_45 = arith.constant 1.000000e+00 : f32
    %67 = vector.broadcast %cst_45 : f32 to vector<16x1xf32>
    %68 = arith.maximumf %66, %67 : vector<16x1xf32>
    %69 = tpu.reciprocal %68 {approx = true} : vector<16x1xf32> -> vector<16x1xf32>
    %70 = vector.extract_strided_slice %54 {offsets = [0, 128], sizes = [16, 128], strides = [1, 1]} : vector<128x256xf32> to vector<16x128xf32>
    %71 = vector.broadcast %69 : vector<16x1xf32> to vector<16x128xf32>
    %72 = arith.mulf %63, %71 : vector<16x128xf32>
    %73 = arith.truncf %72 : vector<16x128xf32> to vector<16x128xbf16>
    %c0_46 = arith.constant 0 : index
    %c0_47 = arith.constant 0 : index
    %74 = vector.load %arg11[%c0_46, %c0_47] : memref<128x128xbf16, #tpu.memory_space<vmem>>, vector<128x128xbf16>
    %cst_48 = arith.constant dense<0.000000e+00> : vector<16x128xf32>
    %75 = tpu.matmul %73, %74, %cst_48 {dimension_numbers = #tpu.dot_dimension_numbers<[1], [0], [0], [1], [0, 0, 1, 1], [], []>} : vector<16x128xbf16>, vector<128x128xbf16>, vector<16x128xf32> -> vector<16x128xf32>
    %76 = arith.addf %75, %70 : vector<16x128xf32>
    %c0_49 = arith.constant 0 : index
    %c0_50 = arith.constant 0 : index
    %77 = vector.load %arg12[%c0_49, %c0_50] : memref<1x128xf32, #tpu.memory_space<vmem>>, vector<1x128xf32>
    %78 = vector.broadcast %77 : vector<1x128xf32> to vector<16x128xf32>
    %79 = arith.addf %76, %78 : vector<16x128xf32>
    %cst_51 = arith.constant 0.000000e+00 : f32
    %80 = vector.broadcast %cst_51 : f32 to vector<16x128xf32>
    %81 = arith.maximumf %79, %80 : vector<16x128xf32>
    %82 = arith.mulf %81, %81 : vector<16x128xf32>
    %cst_52 = arith.constant dense<0.000000e+00> : vector<16xf32>
    %83 = vector.multi_reduction <add>, %82, %cst_52 [1] : vector<16x128xf32> to vector<16xf32>
    %84 = vector.shape_cast %83 : vector<16xf32> to vector<16x1xf32>
    %cst_53 = arith.constant 0.000000e+00 : f32
    %85 = vector.broadcast %cst_53 : f32 to vector<16x1xf32>
    %86 = arith.cmpf oeq, %84, %85 : vector<16x1xf32>
    %87 = math.rsqrt %84 : vector<16x1xf32>
    %cst_54 = arith.constant 1.000000e+00 : f32
    %88 = vector.broadcast %cst_54 : f32 to vector<16x1xf32>
    %89 = arith.select %86, %88, %87 : vector<16x1xi1>, vector<16x1xf32>
    %90 = vector.broadcast %89 : vector<16x1xf32> to vector<16x128xf32>
    %91 = arith.mulf %81, %90 : vector<16x128xf32>
    %c0_55 = arith.constant 0 : index
    %c0_56 = arith.constant 0 : index
    %92 = vector.load %arg15[%c0_55, %c0_56] : memref<16x128xf32, #tpu.memory_space<vmem>>, vector<16x128xf32>
    %93 = arith.addf %91, %92 : vector<16x128xf32>
    %c0_57 = arith.constant 0 : index
    %c0_58 = arith.constant 0 : index
    %94 = vector.load %arg13[%c0_57, %c0_58] : memref<16x128xf32, #tpu.memory_space<vmem>>, vector<16x128xf32>
    tpu.vector_store %arg13[%c0_57, %c0_58], %93 {strides = array<i32>} : memref<16x128xf32, #tpu.memory_space<vmem>>, vector<16x128xf32>,
    return
  }
}

</mosaic_0001>

<llo_original>
// kernel: pinsage_forward.1
$region0: #{pinsage_forward.1}
  #allocation0 [shape = 'u32[]', space=smem, size = 0x4, offset = 0x4, fixed_abs, tag = 'smem constant byte address 0x4 - core index']
  #allocation1 [shape = 'u32[72,128]{1,0:T(1,128)}', space=vmem, size = 0x9000, scoped, tag = 'internal scratch']
  #allocation2 [shape = 'bf16[128,128]{1,0:T(8,128)(2,1)}', space=vmem, size = 0x8000, scoped, tag = 'scratch operand']
  #allocation3 [shape = 'f32[16,128]{1,0:T(8,128)}', space=vmem, size = 0x2000, scoped, tag = 'scratch operand']
  %s0 = inlined_call_operand.vmem [shape: bf16[128,128], index: 0, kind: input, shape index: {}]
  %s1 = inlined_call_operand.vmem [shape: bf16[128,128], index: 1, kind: input, shape index: {}]
  %s2 = inlined_call_operand.vmem [shape: f32[1,128], index: 2, kind: input, shape index: {}]
  %s3 = inlined_call_operand.vmem [shape: bf16[32,128], index: 3, kind: input, shape index: {}]
  %s4 = inlined_call_operand.vmem [shape: bf16[128,256], index: 4, kind: input, shape index: {}]
  %s5 = inlined_call_operand.vmem [shape: f32[1,128], index: 5, kind: input, shape index: {}]
  %s6 = inlined_call_operand.vmem [shape: bf16[128,128], index: 6, kind: input, shape index: {}]
  %s7 = inlined_call_operand.vmem [shape: f32[1,128], index: 7, kind: input, shape index: {}]
  %s8 = inlined_call_operand.vmem [shape: bf16[16,128], index: 8, kind: input, shape index: {}]
  %s9 = inlined_call_operand.vmem [shape: bf16[128,256], index: 9, kind: input, shape index: {}]
  %s10 = inlined_call_operand.vmem [shape: f32[1,128], index: 10, kind: input, shape index: {}]
  %s11 = inlined_call_operand.vmem [shape: bf16[128,128], index: 11, kind: input, shape index: {}]
  %s12 = inlined_call_operand.vmem [shape: f32[1,128], index: 12, kind: input, shape index: {}]
  %s13 = inlined_call_operand.hbm [shape: f32[16,128], index: 13, kind: output, shape index: {}]
  %s14 = sld [smem:[#allocation0]]
  $region62: #{pinsage_forward.1} parent=0
    _
  %s16 = ssub.s32 1, %s14
  %s17 = scalar_select 0, %s16, %s14
  $region1: #{pinsage_forward.1} parent=0
    #allocation4 [shape = 'u8[8192]{0}', space=vmem, size = 0x2000, scoped, tag = 'output window, operand 0, single buffered']
    #allocation5 [shape = 's32[1]{0}', space=sflag, size = 0x4, scoped, tag = 'scoped memory for pinsage_forward.1']
    %18 = vsyncpa [#allocation5], 0
    // Predicated region
    $region2: #{pinsage_forward.1} parent=1 // pred_check
      _
    $region3: #{pinsage_forward.1} parent=1 // pred_check_branch
      %20 = sbr.rel (0) target = $region5
    $region4: #{pinsage_forward.1} parent=1 // pred_region
      _
    $region5: #{pinsage_forward.1} parent=1 // pred_fallthru
      _
    // Predicated region
    $region6: #{pinsage_forward.1} parent=1 // pred_check
      _
    $region7: #{pinsage_forward.1} parent=1 // pred_check_branch
      %22 = sbr.rel (0) target = $region9
    $region8: #{pinsage_forward.1} parent=1 // pred_region
      _
    $region9: #{pinsage_forward.1} parent=1 // pred_fallthru
      _
    // Predicated region
    $region10: #{pinsage_forward.1} parent=1 // pred_check
      _
    $region11: #{pinsage_forward.1} parent=1 // pred_check_branch
      %24 = sbr.rel (0) target = $region13
    $region12: #{pinsage_forward.1} parent=1 // pred_region
      _
    $region13: #{pinsage_forward.1} parent=1 // pred_fallthru
      _
    // Predicated region
    $region14: #{pinsage_forward.1} parent=1 // pred_check
      _
    $region15: #{pinsage_forward.1} parent=1 // pred_check_branch
      %26 = sbr.rel (0) target = $region17
    $region16: #{pinsage_forward.1} parent=1 // pred_region
      _
    $region17: #{pinsage_forward.1} parent=1 // pred_fallthru
      _
    // Predicated region
    $region18: #{pinsage_forward.1} parent=1 // pred_check
      _
    $region19: #{pinsage_forward.1} parent=1 // pred_check_branch
      %28 = sbr.rel (0) target = $region21
    $region20: #{pinsage_forward.1} parent=1 // pred_region
      _
    $region21: #{pinsage_forward.1} parent=1 // pred_fallthru
      _
    // Predicated region
    $region22: #{pinsage_forward.1} parent=1 // pred_check
      _
    $region23: #{pinsage_forward.1} parent=1 // pred_check_branch
      %30 = sbr.rel (0) target = $region25
    $region24: #{pinsage_forward.1} parent=1 // pred_region
      _
    $region25: #{pinsage_forward.1} parent=1 // pred_fallthru
      _
    // Predicated region
    $region26: #{pinsage_forward.1} parent=1 // pred_check
      _
    $region27: #{pinsage_forward.1} parent=1 // pred_check_branch
      %32 = sbr.rel (0) target = $region29
    $region28: #{pinsage_forward.1} parent=1 // pred_region
      _
    $region29: #{pinsage_forward.1} parent=1 // pred_fallthru
      _
    // Predicated region
    $region30: #{pinsage_forward.1} parent=1 // pred_check
      _
    $region31: #{pinsage_forward.1} parent=1 // pred_check_branch
      %34 = sbr.rel (0) target = $region33
    $region32: #{pinsage_forward.1} parent=1 // pred_region
      _
    $region33: #{pinsage_forward.1} parent=1 // pred_fallthru
      _
    // Predicated region
    $region34: #{pinsage_forward.1} parent=1 // pred_check
      _
    $region35: #{pinsage_forward.1} parent=1 // pred_check_branch
      %36 = sbr.rel (0) target = $region37
    $region36: #{pinsage_forward.1} parent=1 // pred_region
      _
    $region37: #{pinsage_forward.1} parent=1 // pred_fallthru
      _
    // Predicated region
    $region38: #{pinsage_forward.1} parent=1 // pred_check
      _
    $region39: #{pinsage_forward.1} parent=1 // pred_check_branch
      %38 = sbr.rel (0) target = $region41
    $region40: #{pinsage_forward.1} parent=1 // pred_region
      _
    $region41: #{pinsage_forward.1} parent=1 // pred_fallthru
      _
    // Predicated region
    $region42: #{pinsage_forward.1} parent=1 // pred_check
      _
    $region43: #{pinsage_forward.1} parent=1 // pred_check_branch
      %40 = sbr.rel (0) target = $region45
    $region44: #{pinsage_forward.1} parent=1 // pred_region
      _
    $region45: #{pinsage_forward.1} parent=1 // pred_fallthru
      _
    // Predicated region
    $region46: #{pinsage_forward.1} parent=1 // pred_check
      _
    $region47: #{pinsage_forward.1} parent=1 // pred_check_branch
      %42 = sbr.rel (0) target = $region49
    $region48: #{pinsage_forward.1} parent=1 // pred_region
      _
    $region49: #{pinsage_forward.1} parent=1 // pred_fallthru
      _
    // Predicated region
    $region50: #{pinsage_forward.1} parent=1 // pred_check
      _
    $region51: #{pinsage_forward.1} parent=1 // pred_check_branch
      %44 = sbr.rel (0) target = $region53
    $region52: #{pinsage_forward.1} parent=1 // pred_region
      _
    $region53: #{pinsage_forward.1} parent=1 // pred_fallthru
      _
    %v45 = vld [vmem:[%s0] sm:$0xf]
    %v46 = vld [vmem:[%s0 + $0x4] sm:$0xf]
    %v47 = vld [vmem:[%s0 + $0x8] sm:$0xf]
    %v48 = vld [vmem:[%s0 + $0xc] sm:$0xf]
    %v49 = vld [vmem:[%s0 + $0x10] sm:$0xf]
    %v50 = vld [vmem:[%s0 + $0x14] sm:$0xf]
    %v51 = vld [vmem:[%s0 + $0x18] sm:$0xf]
    %v52 = vld [vmem:[%s0 + $0x1c] sm:$0xf]
    %v53 = vld [vmem:[%s0 + $0x20] sm:$0xf]
    %v54 = vld [vmem:[%s0 + $0x24] sm:$0xf]
    %v55 = vld [vmem:[%s0 + $0x28] sm:$0xf]
    %v56 = vld [vmem:[%s0 + $0x2c] sm:$0xf]
    %v57 = vld [vmem:[%s0 + $0x30] sm:$0xf]
    %v58 = vld [vmem:[%s0 + $0x34] sm:$0xf]
    %v59 = vld [vmem:[%s0 + $0x38] sm:$0xf]
    %v60 = vld [vmem:[%s0 + $0x3c] sm:$0xf]
    %v61 = vld [vmem:[%s1] sm:$0xf]
    %v62 = vld [vmem:[%s1 + $0x4] sm:$0xf]
    %v63 = vld [vmem:[%s1 + $0x8] sm:$0xf]
    %v64 = vld [vmem:[%s1 + $0xc] sm:$0xf]
    %v65 = vld [vmem:[%s1 + $0x10] sm:$0xf]
    %v66 = vld [vmem:[%s1 + $0x14] sm:$0xf]
    %v67 = vld [vmem:[%s1 + $0x18] sm:$0xf]
    %v68 = vld [vmem:[%s1 + $0x1c] sm:$0xf]
    %v69 = vld [vmem:[%s1 + $0x20] sm:$0xf]
    %v70 = vld [vmem:[%s1 + $0x24] sm:$0xf]
    %v71 = vld [vmem:[%s1 + $0x28] sm:$0xf]
    %v72 = vld [vmem:[%s1 + $0x2c] sm:$0xf]
    %v73 = vld [vmem:[%s1 + $0x30] sm:$0xf]
    %v74 = vld [vmem:[%s1 + $0x34] sm:$0xf]
    %v75 = vld [vmem:[%s1 + $0x38] sm:$0xf]
    %v76 = vld [vmem:[%s1 + $0x3c] sm:$0xf]
    %v77 = vld [vmem:[%s2] sm:$0x1]
    %v79 = vperm.slane %v77, 0
    %v97 = vunpack.c.l.b16 %v45
    %v98 = vunpack.c.l.b16 %v46
    %v99 = vunpack.c.l.b16 %v47
    %v100 = vunpack.c.l.b16 %v48
    %v101 = vunpack.c.l.b16 %v49
    %v102 = vunpack.c.l.b16 %v50
    %v103 = vunpack.c.l.b16 %v51
    %v104 = vunpack.c.l.b16 %v52
    %v105 = vunpack.c.l.b16 %v53
    %v106 = vunpack.c.l.b16 %v54
    %v107 = vunpack.c.l.b16 %v55
    %v108 = vunpack.c.l.b16 %v56
    %v109 = vunpack.c.l.b16 %v57
    %v110 = vunpack.c.l.b16 %v58
    %v111 = vunpack.c.l.b16 %v59
    %v112 = vunpack.c.l.b16 %v60
    %v113 = vpack.c.b16 %v98, %v97
    %v114 = vpack.c.b16 %v100, %v99
    %v115 = vpack.c.b16 %v102, %v101
    %v116 = vpack.c.b16 %v104, %v103
    %v117 = vpack.c.b16 %v106, %v105
    %v118 = vpack.c.b16 %v108, %v107
    %v119 = vpack.c.b16 %v110, %v109
    %v120 = vpack.c.b16 %v112, %v111
    %v145 = vunpack.c.l.b16 %v61
    %v146 = vunpack.c.l.b16 %v62
    %v147 = vunpack.c.l.b16 %v63
    %v148 = vunpack.c.l.b16 %v64
    %v149 = vunpack.c.l.b16 %v65
    %v150 = vunpack.c.l.b16 %v66
    %v151 = vunpack.c.l.b16 %v67
    %v152 = vunpack.c.l.b16 %v68
    %v153 = vunpack.c.l.b16 %v69
    %v154 = vunpack.c.l.b16 %v70
    %v155 = vunpack.c.l.b16 %v71
    %v156 = vunpack.c.l.b16 %v72
    %v157 = vunpack.c.l.b16 %v73
    %v158 = vunpack.c.l.b16 %v74
    %v159 = vunpack.c.l.b16 %v75
    %v160 = vunpack.c.l.b16 %v76
    %v161 = vpack.c.b16 %v146, %v145
    %v162 = vpack.c.b16 %v148, %v147
    %v163 = vpack.c.b16 %v150, %v149
    %v164 = vpack.c.b16 %v152, %v151
    %v165 = vpack.c.b16 %v154, %v153
    %v166 = vpack.c.b16 %v156, %v155
    %v167 = vpack.c.b16 %v158, %v157
    %v168 = vpack.c.b16 %v160, %v159
    %177 = vmatpush.bf16.msra.mxu0 %v168
    %178 = vmatpush.bf16.msra.mxu0 %v167
    %179 = vmatpush.bf16.msra.mxu0 %v166
    %180 = vmatpush.bf16.msra.mxu0 %v165
    %181 = vmatpush.bf16.msra.mxu0 %v164
    %182 = vmatpush.bf16.msra.mxu0 %v163
    %183 = vmatpush.bf16.msra.mxu0 %v162
    %184 = vmatpush.bf16.msra.mxu0 %v161
    %185 = vmatmul.bf16.gmra.mxu0 %v113
    %v186 = vpop.f32.mrf.mxu0
    %v187 = vadd.f32 %v79, %v186
    %v188 = vpop.f32.mrf.mxu0
    %v189 = vadd.f32 %v79, %v188
    %190 = vmatmul.bf16.gmra.mxu0 %v114
    %v191 = vpop.f32.mrf.mxu0
    %v192 = vadd.f32 %v79, %v191
    %v193 = vpop.f32.mrf.mxu0
    %v194 = vadd.f32 %v79, %v193
    %195 = vmatmul.bf16.gmra.mxu0 %v115
    %v196 = vpop.f32.mrf.mxu0
    %v197 = vadd.f32 %v79, %v196
    %v198 = vpop.f32.mrf.mxu0
    %v199 = vadd.f32 %v79, %v198
    %200 = vmatmul.bf16.gmra.mxu0 %v116
    %v201 = vpop.f32.mrf.mxu0
    %v202 = vadd.f32 %v79, %v201
    %v203 = vpop.f32.mrf.mxu0
    %v204 = vadd.f32 %v79, %v203
    %205 = vmatmul.bf16.gmra.mxu0 %v117
    %v206 = vpop.f32.mrf.mxu0
    %v207 = vadd.f32 %v79, %v206
    %v208 = vpop.f32.mrf.mxu0
    %v209 = vadd.f32 %v79, %v208
    %210 = vmatmul.bf16.gmra.mxu0 %v118
    %v211 = vpop.f32.mrf.mxu0
    %v212 = vadd.f32 %v79, %v211
    %v213 = vpop.f32.mrf.mxu0
    %v214 = vadd.f32 %v79, %v213
    %215 = vmatmul.bf16.gmra.mxu0 %v119
    %v216 = vpop.f32.mrf.mxu0
    %v217 = vadd.f32 %v79, %v216
    %v218 = vpop.f32.mrf.mxu0
    %v219 = vadd.f32 %v79, %v218
    %220 = vmatmul.bf16.gmra.mxu0 %v120
    %v221 = vpop.f32.mrf.mxu0
    %v222 = vadd.f32 %v79, %v221
    %v223 = vpop.f32.mrf.mxu0
    %v224 = vadd.f32 %v79, %v223
    %225 = vdwg.mxu0
    %226 = vst [vmem:[#allocation3] sm:$0xff] %v187
    %227 = vst [vmem:[#allocation3 + $0x8] sm:$0xff] %v189
    %v228 = vpack.c.bf16 %v187, %v187
    %v229 = vpack.c.bf16 %v189, %v189
    %v230 = vpack.c.bf16 %v192, %v192
    %v231 = vpack.c.bf16 %v194, %v194
    %v232 = vpack.c.bf16 %v197, %v197
    %v233 = vpack.c.bf16 %v199, %v199
    %v234 = vpack.c.bf16 %v202, %v202
    %v235 = vpack.c.bf16 %v204, %v204
    %v236 = vpack.c.bf16 %v207, %v207
    %v237 = vpack.c.bf16 %v209, %v209
    %v238 = vpack.c.bf16 %v212, %v212
    %v239 = vpack.c.bf16 %v214, %v214
    %v240 = vpack.c.bf16 %v217, %v217
    %v241 = vpack.c.bf16 %v219, %v219
    %v242 = vpack.c.bf16 %v222, %v222
    %v243 = vpack.c.bf16 %v224, %v224
    %244 = vst [vmem:[#allocation2] sm:$0xf] %v228
    %245 = vst [vmem:[#allocation2 + $0x4] sm:$0xf] %v229
    %246 = vst [vmem:[#allocation2 + $0x8] sm:$0xf] %v230
    %247 = vst [vmem:[#allocation2 + $0xc] sm:$0xf] %v231
    %248 = vst [vmem:[#allocation2 + $0x10] sm:$0xf] %v232
    %249 = vst [vmem:[#allocation2 + $0x14] sm:$0xf] %v233
    %250 = vst [vmem:[#allocation2 + $0x18] sm:$0xf] %v234
    %251 = vst [vmem:[#allocation2 + $0x1c] sm:$0xf] %v235
    %252 = vst [vmem:[#allocation2 + $0x20] sm:$0xf] %v236
    %253 = vst [vmem:[#allocation2 + $0x24] sm:$0xf] %v237
    %254 = vst [vmem:[#allocation2 + $0x28] sm:$0xf] %v238
    %255 = vst [vmem:[#allocation2 + $0x2c] sm:$0xf] %v239
    %256 = vst [vmem:[#allocation2 + $0x30] sm:$0xf] %v240
    %257 = vst [vmem:[#allocation2 + $0x34] sm:$0xf] %v241
    %258 = vst [vmem:[#allocation2 + $0x38] sm:$0xf] %v242
    %259 = vst [vmem:[#allocation2 + $0x3c] sm:$0xf] %v243
    %v260 = vld [vmem:[#allocation2] sm:$0xf]
    %v261 = vld [vmem:[#allocation2 + $0x4] sm:$0xf]
    %v262 = vld [vmem:[#allocation2 + $0x8] sm:$0xf]
    %v263 = vld [vmem:[#allocation2 + $0xc] sm:$0xf]
    %v264 = vld [vmem:[#allocation2 + $0x10] sm:$0xf]
    %v265 = vld [vmem:[#allocation2 + $0x14] sm:$0xf]
    %v266 = vld [vmem:[#allocation2 + $0x18] sm:$0xf]
    %v267 = vld [vmem:[#allocation2 + $0x1c] sm:$0xf]
    %v268 = vld [vmem:[#allocation2 + $0x20] sm:$0xf]
    %v269 = vld [vmem:[#allocation2 + $0x24] sm:$0xf]
    %v270 = vld [vmem:[#allocation2 + $0x28] sm:$0xf]
    %v271 = vld [vmem:[#allocation2 + $0x2c] sm:$0xf]
    %v272 = vld [vmem:[#allocation2 + $0x30] sm:$0xf]
    %v273 = vld [vmem:[#allocation2 + $0x34] sm:$0xf]
    %v274 = vld [vmem:[#allocation2 + $0x38] sm:$0xf]
    %v275 = vld [vmem:[#allocation2 + $0x3c] sm:$0xf]
    %v276 = vld [vmem:[%s4] sm:$0xff]
    %v277 = vld [vmem:[%s4 + $0x8] sm:$0xff]
    %v278 = vld [vmem:[%s4 + $0x10] sm:$0xff]
    %v279 = vld [vmem:[%s4 + $0x18] sm:$0xff]
    %v280 = vld [vmem:[%s4 + $0x20] sm:$0xff]
    %v281 = vld [vmem:[%s4 + $0x28] sm:$0xff]
    %v282 = vld [vmem:[%s4 + $0x30] sm:$0xff]
    %v283 = vld [vmem:[%s4 + $0x38] sm:$0xff]
    %v284 = vld [vmem:[%s4 + $0x40] sm:$0xff]
    %v285 = vld [vmem:[%s4 + $0x48] sm:$0xff]
    %v286 = vld [vmem:[%s4 + $0x50] sm:$0xff]
    %v287 = vld [vmem:[%s4 + $0x58] sm:$0xff]
    %v288 = vld [vmem:[%s4 + $0x60] sm:$0xff]
    %v289 = vld [vmem:[%s4 + $0x68] sm:$0xff]
    %v290 = vld [vmem:[%s4 + $0x70] sm:$0xff]
    %v291 = vld [vmem:[%s4 + $0x78] sm:$0xff]
    %v308 = vunpack.c.l.b16 %v260
    %v309 = vunpack.c.l.b16 %v261
    %v310 = vunpack.c.l.b16 %v262
    %v311 = vunpack.c.l.b16 %v263
    %v312 = vunpack.c.l.b16 %v264
    %v313 = vunpack.c.l.b16 %v265
    %v314 = vunpack.c.l.b16 %v266
    %v315 = vunpack.c.l.b16 %v267
    %v316 = vunpack.c.l.b16 %v268
    %v317 = vunpack.c.l.b16 %v269
    %v318 = vunpack.c.l.b16 %v270
    %v319 = vunpack.c.l.b16 %v271
    %v320 = vunpack.c.l.b16 %v272
    %v321 = vunpack.c.l.b16 %v273
    %v322 = vunpack.c.l.b16 %v274
    %v323 = vunpack.c.l.b16 %v275
    %v324 = vpack.c.b16 %v309, %v308
    %v325 = vpack.c.b16 %v311, %v310
    %v326 = vpack.c.b16 %v313, %v312
    %v327 = vpack.c.b16 %v315, %v314
    %v328 = vpack.c.b16 %v317, %v316
    %v329 = vpack.c.b16 %v319, %v318
    %v330 = vpack.c.b16 %v321, %v320
    %v331 = vpack.c.b16 %v323, %v322
    %v356 = vunpack.c.l.b16 %v276
    %v357 = vunpack.c.h.b16 %v276
    %v358 = vunpack.c.l.b16 %v277
    %v359 = vunpack.c.h.b16 %v277
    %v360 = vunpack.c.l.b16 %v278
    %v361 = vunpack.c.h.b16 %v278
    %v362 = vunpack.c.l.b16 %v279
    %v363 = vunpack.c.h.b16 %v279
    %v364 = vunpack.c.l.b16 %v280
    %v365 = vunpack.c.h.b16 %v280
    %v366 = vunpack.c.l.b16 %v281
    %v367 = vunpack.c.h.b16 %v281
    %v368 = vunpack.c.l.b16 %v282
    %v369 = vunpack.c.h.b16 %v282
    %v370 = vunpack.c.l.b16 %v283
    %v371 = vunpack.c.h.b16 %v283
    %v372 = vunpack.c.l.b16 %v284
    %v373 = vunpack.c.h.b16 %v284
    %v374 = vunpack.c.l.b16 %v285
    %v375 = vunpack.c.h.b16 %v285
    %v376 = vunpack.c.l.b16 %v286
    %v377 = vunpack.c.h.b16 %v286
    %v378 = vunpack.c.l.b16 %v287
    %v379 = vunpack.c.h.b16 %v287
    %v380 = vunpack.c.l.b16 %v288
    %v381 = vunpack.c.h.b16 %v288
    %v382 = vunpack.c.l.b16 %v289
    %v383 = vunpack.c.h.b16 %v289
    %v384 = vunpack.c.l.b16 %v290
    %v385 = vunpack.c.h.b16 %v290
    %v386 = vunpack.c.l.b16 %v291
    %v387 = vunpack.c.h.b16 %v291
    %v388 = vpack.c.b16 %v358, %v356
    %v389 = vpack.c.b16 %v359, %v357
    %v390 = vpack.c.b16 %v362, %v360
    %v391 = vpack.c.b16 %v363, %v361
    %v392 = vpack.c.b16 %v366, %v364
    %v393 = vpack.c.b16 %v367, %v365
    %v394 = vpack.c.b16 %v370, %v368
    %v395 = vpack.c.b16 %v371, %v369
    %v396 = vpack.c.b16 %v374, %v372
    %v397 = vpack.c.b16 %v375, %v373
    %v398 = vpack.c.b16 %v378, %v376
    %v399 = vpack.c.b16 %v379, %v377
    %v400 = vpack.c.b16 %v382, %v380
    %v401 = vpack.c.b16 %v383, %v381
    %v402 = vpack.c.b16 %v386, %v384
    %v403 = vpack.c.b16 %v387, %v385
    %420 = vmatpush.bf16.msra.mxu0 %v402
    %421 = vmatpush.bf16.msra.mxu0 %v400
    %422 = vmatpush.bf16.msra.mxu0 %v398
    %423 = vmatpush.bf16.msra.mxu0 %v396
    %424 = vmatpush.bf16.msra.mxu0 %v394
    %425 = vmatpush.bf16.msra.mxu0 %v392
    %426 = vmatpush.bf16.msra.mxu0 %v390
    %427 = vmatpush.bf16.msra.mxu0 %v388
    %428 = vmatmul.bf16.gmra.mxu0 %v324
    %v429 = vpop.f32.mrf.mxu0
    %v430 = vadd.f32 0.0, %v429
    %v431 = vpop.f32.mrf.mxu0
    %v432 = vadd.f32 0.0, %v431
    %433 = vmatmul.bf16.gmra.mxu0 %v325
    %v434 = vpop.f32.mrf.mxu0
    %v435 = vadd.f32 0.0, %v434
    %v436 = vpop.f32.mrf.mxu0
    %v437 = vadd.f32 0.0, %v436
    %438 = vmatmul.bf16.gmra.mxu0 %v326
    %v439 = vpop.f32.mrf.mxu0
    %v440 = vadd.f32 0.0, %v439
    %v441 = vpop.f32.mrf.mxu0
    %v442 = vadd.f32 0.0, %v441
    %443 = vmatmul.bf16.gmra.mxu0 %v327
    %v444 = vpop.f32.mrf.mxu0
    %v445 = vadd.f32 0.0, %v444
    %v446 = vpop.f32.mrf.mxu0
    %v447 = vadd.f32 0.0, %v446
    %448 = vmatmul.bf16.gmra.mxu0 %v328
    %v449 = vpop.f32.mrf.mxu0
    %v450 = vadd.f32 0.0, %v449
    %v451 = vpop.f32.mrf.mxu0
    %v452 = vadd.f32 0.0, %v451
    %453 = vmatmul.bf16.gmra.mxu0 %v329
    %v454 = vpop.f32.mrf.mxu0
    %v455 = vadd.f32 0.0, %v454
    %v456 = vpop.f32.mrf.mxu0
    %v457 = vadd.f32 0.0, %v456
    %458 = vmatmul.bf16.gmra.mxu0 %v330
    %v459 = vpop.f32.mrf.mxu0
    %v460 = vadd.f32 0.0, %v459
    %v461 = vpop.f32.mrf.mxu0
    %v462 = vadd.f32 0.0, %v461
    %463 = vmatmul.bf16.gmra.mxu0 %v331
    %v464 = vpop.f32.mrf.mxu0
    %v465 = vadd.f32 0.0, %v464
    %v466 = vpop.f32.mrf.mxu0
    %v467 = vadd.f32 0.0, %v466
    %468 = vdwg.mxu0
    %469 = vmatpush.bf16.msra.mxu0 %v403
    %470 = vmatpush.bf16.msra.mxu0 %v401
    %471 = vmatpush.bf16.msra.mxu0 %v399
    %472 = vmatpush.bf16.msra.mxu0 %v397
    %473 = vmatpush.bf16.msra.mxu0 %v395
    %474 = vmatpush.bf16.msra.mxu0 %v393
    %475 = vmatpush.bf16.msra.mxu0 %v391
    %476 = vmatpush.bf16.msra.mxu0 %v389
    %477 = vmatmul.bf16.gmra.mxu0 %v324
    %v478 = vpop.f32.mrf.mxu0
    %v479 = vadd.f32 0.0, %v478
    %v480 = vpop.f32.mrf.mxu0
    %v481 = vadd.f32 0.0, %v480
    %482 = vmatmul.bf16.gmra.mxu0 %v325
    %v483 = vpop.f32.mrf.mxu0
    %v484 = vadd.f32 0.0, %v483
    %v485 = vpop.f32.mrf.mxu0
    %v486 = vadd.f32 0.0, %v485
    %487 = vmatmul.bf16.gmra.mxu0 %v326
    %v488 = vpop.f32.mrf.mxu0
    %v489 = vpop.f32.mrf.mxu0
    %490 = vmatmul.bf16.gmra.mxu0 %v327
    %v491 = vpop.f32.mrf.mxu0
    %v492 = vpop.f32.mrf.mxu0
    %493 = vmatmul.bf16.gmra.mxu0 %v328
    %v494 = vpop.f32.mrf.mxu0
    %v495 = vpop.f32.mrf.mxu0
    %496 = vmatmul.bf16.gmra.mxu0 %v329
    %v497 = vpop.f32.mrf.mxu0
    %v498 = vpop.f32.mrf.mxu0
    %499 = vmatmul.bf16.gmra.mxu0 %v330
    %v500 = vpop.f32.mrf.mxu0
    %v501 = vpop.f32.mrf.mxu0
    %502 = vmatmul.bf16.gmra.mxu0 %v331
    %v503 = vpop.f32.mrf.mxu0
    %v504 = vpop.f32.mrf.mxu0
    %505 = vdwg.mxu0
    %v506 = vld [vmem:[%s5] sm:$0x1]
    %v508 = vperm.slane %v506, 0
    %v510 = vadd.f32 %v430, %v508
    %v511 = vadd.f32 %v432, %v508
    %v512 = vadd.f32 %v435, %v508
    %v513 = vadd.f32 %v437, %v508
    %v514 = vadd.f32 %v440, %v508
    %v515 = vadd.f32 %v442, %v508
    %v516 = vadd.f32 %v445, %v508
    %v517 = vadd.f32 %v447, %v508
    %v518 = vadd.f32 %v450, %v508
    %v519 = vadd.f32 %v452, %v508
    %v520 = vadd.f32 %v455, %v508
    %v521 = vadd.f32 %v457, %v508
    %v522 = vadd.f32 %v460, %v508
    %v523 = vadd.f32 %v462, %v508
    %v524 = vadd.f32 %v465, %v508
    %v525 = vadd.f32 %v467, %v508
    %v526 = vmax.f32 %v510, 0.0
    %v527 = vmax.f32 %v511, 0.0
    %v528 = vmax.f32 %v512, 0.0
    %v529 = vmax.f32 %v513, 0.0
    %v530 = vmax.f32 %v514, 0.0
    %v531 = vmax.f32 %v515, 0.0
    %v532 = vmax.f32 %v516, 0.0
    %v533 = vmax.f32 %v517, 0.0
    %v534 = vmax.f32 %v518, 0.0
    %v535 = vmax.f32 %v519, 0.0
    %v536 = vmax.f32 %v520, 0.0
    %v537 = vmax.f32 %v521, 0.0
    %v538 = vmax.f32 %v522, 0.0
    %v539 = vmax.f32 %v523, 0.0
    %v540 = vmax.f32 %v524, 0.0
    %v541 = vmax.f32 %v525, 0.0
    %v542 = vld [vmem:[%s3] sm:$0xf]
    %v543 = vld [vmem:[%s3 + $0x4] sm:$0xf]
    %v544 = vld [vmem:[%s3 + $0x8] sm:$0xf]
    %v545 = vld [vmem:[%s3 + $0xc] sm:$0xf]
    %v546 = vpack.c.bf16 %v527, %v526
    %v547 = vpack.c.bf16 %v529, %v528
    %v548 = vpack.c.bf16 %v531, %v530
    %v549 = vpack.c.bf16 %v533, %v532
    %v550 = vpack.c.bf16 %v535, %v534
    %v551 = vpack.c.bf16 %v537, %v536
    %v552 = vpack.c.bf16 %v539, %v538
    %v553 = vpack.c.bf16 %v541, %v540
    %v558 = vunpack.c.l.b16 %v542
    %v559 = vunpack.c.l.b16 %v543
    %v560 = vunpack.c.l.b16 %v544
    %v561 = vunpack.c.l.b16 %v545
    %v562 = vpack.c.b16 %v559, %v558
    %v563 = vpack.c.b16 %v561, %v560
    %566 = vmatpush.bf16.msra.mxu0 %v553
    %567 = vmatpush.bf16.msra.mxu0 %v552
    %568 = vmatpush.bf16.msra.mxu0 %v551
    %569 = vmatpush.bf16.msra.mxu0 %v550
    %570 = vmatpush.bf16.msra.mxu0 %v549
    %571 = vmatpush.bf16.msra.mxu0 %v548
    %572 = vmatpush.bf16.msra.mxu0 %v547
    %573 = vmatpush.bf16.msra.mxu0 %v546
    %574 = vmatmul.bf16.gmra.mxu0 %v562
    %v575 = vpop.f32.mrf.mxu0
    %v576 = vadd.f32 0.0, %v575
    %v577 = vpop.f32.mrf.mxu0
    %v578 = vadd.f32 0.0, %v577
    %579 = vmatmul.bf16.gmra.mxu0 %v563
    %v580 = vpop.f32.mrf.mxu0
    %v581 = vadd.f32 0.0, %v580
    %v582 = vpop.f32.mrf.mxu0
    %v583 = vadd.f32 0.0, %v582
    %584 = vdwg.mxu0
    %v585 = vunpack.c.l.bf16 %v542
    %v586 = vunpack.c.l.bf16 %v543
    %v587 = vunpack.c.l.bf16 %v544
    %v588 = vunpack.c.l.bf16 %v545
    %589 = vadd.xlane.f32.xlu0 %v585
    %v590 = vpop.xlane.xlu0 %589
    %591 = vadd.xlane.f32.xlu0 %v586
    %v592 = vpop.xlane.xlu0 %591
    %593 = vadd.xlane.f32.xlu0 %v587
    %v594 = vpop.xlane.xlu0 %593
    %595 = vadd.xlane.f32.xlu0 %v588
    %v596 = vpop.xlane.xlu0 %595
    %v597 = vmax.f32 %v590, 1.0
    %v598 = vmax.f32 %v592, 1.0
    %v599 = vmax.f32 %v594, 1.0
    %v600 = vmax.f32 %v596, 1.0
    %v601 = vrcp.pop %v597
    %v602 = vrcp.pop %v598
    %v603 = vrcp.pop %v599
    %v604 = vrcp.pop %v600
    %v605 = vmul.f32 %v576, %v601
    %v606 = vmul.f32 %v578, %v602
    %v607 = vmul.f32 %v581, %v603
    %v608 = vmul.f32 %v583, %v604
    %v609 = vpack.c.bf16 %v606, %v605
    %v610 = vpack.c.bf16 %v608, %v607
    %v611 = vld [vmem:[%s6] sm:$0xf]
    %v612 = vld [vmem:[%s6 + $0x4] sm:$0xf]
    %v613 = vld [vmem:[%s6 + $0x8] sm:$0xf]
    %v614 = vld [vmem:[%s6 + $0xc] sm:$0xf]
    %v615 = vld [vmem:[%s6 + $0x10] sm:$0xf]
    %v616 = vld [vmem:[%s6 + $0x14] sm:$0xf]
    %v617 = vld [vmem:[%s6 + $0x18] sm:$0xf]
    %v618 = vld [vmem:[%s6 + $0x1c] sm:$0xf]
    %v619 = vld [vmem:[%s6 + $0x20] sm:$0xf]
    %v620 = vld [vmem:[%s6 + $0x24] sm:$0xf]
    %v621 = vld [vmem:[%s6 + $0x28] sm:$0xf]
    %v622 = vld [vmem:[%s6 + $0x2c] sm:$0xf]
    %v623 = vld [vmem:[%s6 + $0x30] sm:$0xf]
    %v624 = vld [vmem:[%s6 + $0x34] sm:$0xf]
    %v625 = vld [vmem:[%s6 + $0x38] sm:$0xf]
    %v626 = vld [vmem:[%s6 + $0x3c] sm:$0xf]
    %v643 = vunpack.c.l.b16 %v611
    %v644 = vunpack.c.l.b16 %v612
    %v645 = vunpack.c.l.b16 %v613
    %v646 = vunpack.c.l.b16 %v614
    %v647 = vunpack.c.l.b16 %v615
    %v648 = vunpack.c.l.b16 %v616
    %v649 = vunpack.c.l.b16 %v617
    %v650 = vunpack.c.l.b16 %v618
    %v651 = vunpack.c.l.b16 %v619
    %v652 = vunpack.c.l.b16 %v620
    %v653 = vunpack.c.l.b16 %v621
    %v654 = vunpack.c.l.b16 %v622
    %v655 = vunpack.c.l.b16 %v623
    %v656 = vunpack.c.l.b16 %v624
    %v657 = vunpack.c.l.b16 %v625
    %v658 = vunpack.c.l.b16 %v626
    %v659 = vpack.c.b16 %v644, %v643
    %v660 = vpack.c.b16 %v646, %v645
    %v661 = vpack.c.b16 %v648, %v647
    %v662 = vpack.c.b16 %v650, %v649
    %v663 = vpack.c.b16 %v652, %v651
    %v664 = vpack.c.b16 %v654, %v653
    %v665 = vpack.c.b16 %v656, %v655
    %v666 = vpack.c.b16 %v658, %v657
    %675 = vmatpush.bf16.msra.mxu0 %v666
    %676 = vmatpush.bf16.msra.mxu0 %v665
    %677 = vmatpush.bf16.msra.mxu0 %v664
    %678 = vmatpush.bf16.msra.mxu0 %v663
    %679 = vmatpush.bf16.msra.mxu0 %v662
    %680 = vmatpush.bf16.msra.mxu0 %v661
    %681 = vmatpush.bf16.msra.mxu0 %v660
    %682 = vmatpush.bf16.msra.mxu0 %v659
    %683 = vmatmul.bf16.gmra.mxu0 %v609
    %v684 = vpop.f32.mrf.mxu0
    %v685 = vadd.f32 %v479, %v684
    %v686 = vpop.f32.mrf.mxu0
    %v687 = vadd.f32 %v481, %v686
    %688 = vmatmul.bf16.gmra.mxu0 %v610
    %v689 = vpop.f32.mrf.mxu0
    %v690 = vadd.f32 %v484, %v689
    %v691 = vpop.f32.mrf.mxu0
    %v692 = vadd.f32 %v486, %v691
    %693 = vdwg.mxu0
    %v694 = vld [vmem:[%s7] sm:$0x1]
    %v696 = vperm.slane %v694, 0
    %v698 = vadd.f32 %v685, %v696
    %v699 = vadd.f32 %v687, %v696
    %v700 = vadd.f32 %v690, %v696
    %v701 = vadd.f32 %v692, %v696
    %v702 = vmax.f32 %v698, 0.0
    %v703 = vmax.f32 %v699, 0.0
    %v704 = vmax.f32 %v700, 0.0
    %v705 = vmax.f32 %v701, 0.0
    %v706 = vmul.f32 %v702, %v702
    %v707 = vmul.f32 %v703, %v703
    %v708 = vmul.f32 %v704, %v704
    %v709 = vmul.f32 %v705, %v705
    %710 = vadd.xlane.f32.xlu0 %v706
    %v711 = vpop.xlane.xlu0 %710
    %712 = vadd.xlane.f32.xlu0 %v707
    %v713 = vpop.xlane.xlu0 %712
    %714 = vadd.xlane.f32.xlu0 %v708
    %v715 = vpop.xlane.xlu0 %714
    %716 = vadd.xlane.f32.xlu0 %v709
    %v717 = vpop.xlane.xlu0 %716
    %vm718 = vcmp.eq.f32.partialorder %v711, 0.0
    %vm719 = vcmp.eq.f32.partialorder %v713, 0.0
    %vm720 = vcmp.eq.f32.partialorder %v715, 0.0
    %vm721 = vcmp.eq.f32.partialorder %v717, 0.0
    %v722 = vrsqrt.pop %v711
    %v723 = vmul.f32 %v722, %v711
    %v724 = vmul.f32 %v723, %v722
    %v725 = vmul.f32 0.5, %v724
    %v726 = vsub.f32 1.5, %v725
    %v727 = vmul.f32 %v722, %v726
    %vm728 = vweird.f32 %v711
    %vm729 = vweird.f32 %v722
    %vm730 = vmor %vm728, %vm729
    %v731 = vsel %vm730, %v722, %v727
    %v732 = vrsqrt.pop %v713
    %v733 = vmul.f32 %v732, %v713
    %v734 = vmul.f32 %v733, %v732
    %v735 = vmul.f32 0.5, %v734
    %v736 = vsub.f32 1.5, %v735
    %v737 = vmul.f32 %v732, %v736
    %vm738 = vweird.f32 %v713
    %vm739 = vweird.f32 %v732
    %vm740 = vmor %vm738, %vm739
    %v741 = vsel %vm740, %v732, %v737
    %v742 = vrsqrt.pop %v715
    %v743 = vmul.f32 %v742, %v715
    %v744 = vmul.f32 %v743, %v742
    %v745 = vmul.f32 0.5, %v744
    %v746 = vsub.f32 1.5, %v745
    %v747 = vmul.f32 %v742, %v746
    %vm748 = vweird.f32 %v715
    %vm749 = vweird.f32 %v742
    %vm750 = vmor %vm748, %vm749
    %v751 = vsel %vm750, %v742, %v747
    %v752 = vrsqrt.pop %v717
    %v753 = vmul.f32 %v752, %v717
    %v754 = vmul.f32 %v753, %v752
    %v755 = vmul.f32 0.5, %v754
    %v756 = vsub.f32 1.5, %v755
    %v757 = vmul.f32 %v752, %v756
    %vm758 = vweird.f32 %v717
    %vm759 = vweird.f32 %v752
    %vm760 = vmor %vm758, %vm759
    %v761 = vsel %vm760, %v752, %v757
    %v762 = vsel %vm718, 1.0, %v731
    %v763 = vsel %vm719, 1.0, %v741
    %v764 = vsel %vm720, 1.0, %v751
    %v765 = vsel %vm721, 1.0, %v761
    %v766 = vmul.f32 %v702, %v762
    %v767 = vmul.f32 %v703, %v763
    %v768 = vmul.f32 %v704, %v764
    %v769 = vmul.f32 %v705, %v765
    %v770 = vpack.c.bf16 %v766, %v766
    %v771 = vpack.c.bf16 %v767, %v767
    %v772 = vpack.c.bf16 %v768, %v768
    %v773 = vpack.c.bf16 %v769, %v769
    %774 = vst [vmem:[#allocation2] sm:$0xf] %v770
    %775 = vst [vmem:[#allocation2 + $0x4] sm:$0xf] %v771
    %776 = vst [vmem:[#allocation2 + $0x8] sm:$0xf] %v772
    %777 = vst [vmem:[#allocation2 + $0xc] sm:$0xf] %v773
    %v778 = vld [vmem:[#allocation2] sm:$0xf]
    %v779 = vld [vmem:[#allocation2 + $0x4] sm:$0xf]
    %v780 = vld [vmem:[#allocation2 + $0x8] sm:$0xf]
    %v781 = vld [vmem:[#allocation2 + $0xc] sm:$0xf]
    %v782 = vld [vmem:[#allocation2 + $0x10] sm:$0xf]
    %v783 = vld [vmem:[#allocation2 + $0x14] sm:$0xf]
    %v784 = vld [vmem:[#allocation2 + $0x18] sm:$0xf]
    %v785 = vld [vmem:[#allocation2 + $0x1c] sm:$0xf]
    %v786 = vld [vmem:[#allocation2 + $0x20] sm:$0xf]
    %v787 = vld [vmem:[#allocation2 + $0x24] sm:$0xf]
    %v788 = vld [vmem:[#allocation2 + $0x28] sm:$0xf]
    %v789 = vld [vmem:[#allocation2 + $0x2c] sm:$0xf]
    %v790 = vld [vmem:[#allocation2 + $0x30] sm:$0xf]
    %v791 = vld [vmem:[#allocation2 + $0x34] sm:$0xf]
    %v792 = vld [vmem:[#allocation2 + $0x38] sm:$0xf]
    %v793 = vld [vmem:[#allocation2 + $0x3c] sm:$0xf]
    %v794 = vld [vmem:[%s9] sm:$0xff]
    %v795 = vld [vmem:[%s9 + $0x8] sm:$0xff]
    %v796 = vld [vmem:[%s9 + $0x10] sm:$0xff]
    %v797 = vld [vmem:[%s9 + $0x18] sm:$0xff]
    %v798 = vld [vmem:[%s9 + $0x20] sm:$0xff]
    %v799 = vld [vmem:[%s9 + $0x28] sm:$0xff]
    %v800 = vld [vmem:[%s9 + $0x30] sm:$0xff]
    %v801 = vld [vmem:[%s9 + $0x38] sm:$0xff]
    %v802 = vld [vmem:[%s9 + $0x40] sm:$0xff]
    %v803 = vld [vmem:[%s9 + $0x48] sm:$0xff]
    %v804 = vld [vmem:[%s9 + $0x50] sm:$0xff]
    %v805 = vld [vmem:[%s9 + $0x58] sm:$0xff]
    %v806 = vld [vmem:[%s9 + $0x60] sm:$0xff]
    %v807 = vld [vmem:[%s9 + $0x68] sm:$0xff]
    %v808 = vld [vmem:[%s9 + $0x70] sm:$0xff]
    %v809 = vld [vmem:[%s9 + $0x78] sm:$0xff]
    %v826 = vunpack.c.l.b16 %v778
    %v827 = vunpack.c.l.b16 %v779
    %v828 = vunpack.c.l.b16 %v780
    %v829 = vunpack.c.l.b16 %v781
    %v830 = vunpack.c.l.b16 %v782
    %v831 = vunpack.c.l.b16 %v783
    %v832 = vunpack.c.l.b16 %v784
    %v833 = vunpack.c.l.b16 %v785
    %v834 = vunpack.c.l.b16 %v786
    %v835 = vunpack.c.l.b16 %v787
    %v836 = vunpack.c.l.b16 %v788
    %v837 = vunpack.c.l.b16 %v789
    %v838 = vunpack.c.l.b16 %v790
    %v839 = vunpack.c.l.b16 %v791
    %v840 = vunpack.c.l.b16 %v792
    %v841 = vunpack.c.l.b16 %v793
    %v842 = vpack.c.b16 %v827, %v826
    %v843 = vpack.c.b16 %v829, %v828
    %v844 = vpack.c.b16 %v831, %v830
    %v845 = vpack.c.b16 %v833, %v832
    %v846 = vpack.c.b16 %v835, %v834
    %v847 = vpack.c.b16 %v837, %v836
    %v848 = vpack.c.b16 %v839, %v838
    %v849 = vpack.c.b16 %v841, %v840
    %v874 = vunpack.c.l.b16 %v794
    %v875 = vunpack.c.h.b16 %v794
    %v876 = vunpack.c.l.b16 %v795
    %v877 = vunpack.c.h.b16 %v795
    %v878 = vunpack.c.l.b16 %v796
    %v879 = vunpack.c.h.b16 %v796
    %v880 = vunpack.c.l.b16 %v797
    %v881 = vunpack.c.h.b16 %v797
    %v882 = vunpack.c.l.b16 %v798
    %v883 = vunpack.c.h.b16 %v798
    %v884 = vunpack.c.l.b16 %v799
    %v885 = vunpack.c.h.b16 %v799
    %v886 = vunpack.c.l.b16 %v800
    %v887 = vunpack.c.h.b16 %v800
    %v888 = vunpack.c.l.b16 %v801
    %v889 = vunpack.c.h.b16 %v801
    %v890 = vunpack.c.l.b16 %v802
    %v891 = vunpack.c.h.b16 %v802
    %v892 = vunpack.c.l.b16 %v803
    %v893 = vunpack.c.h.b16 %v803
    %v894 = vunpack.c.l.b16 %v804
    %v895 = vunpack.c.h.b16 %v804
    %v896 = vunpack.c.l.b16 %v805
    %v897 = vunpack.c.h.b16 %v805
    %v898 = vunpack.c.l.b16 %v806
    %v899 = vunpack.c.h.b16 %v806
    %v900 = vunpack.c.l.b16 %v807
    %v901 = vunpack.c.h.b16 %v807
    %v902 = vunpack.c.l.b16 %v808
    %v903 = vunpack.c.h.b16 %v808
    %v904 = vunpack.c.l.b16 %v809
    %v905 = vunpack.c.h.b16 %v809
    %v906 = vpack.c.b16 %v876, %v874
    %v907 = vpack.c.b16 %v877, %v875
    %v908 = vpack.c.b16 %v880, %v878
    %v909 = vpack.c.b16 %v881, %v879
    %v910 = vpack.c.b16 %v884, %v882
    %v911 = vpack.c.b16 %v885, %v883
    %v912 = vpack.c.b16 %v888, %v886
    %v913 = vpack.c.b16 %v889, %v887
    %v914 = vpack.c.b16 %v892, %v890
    %v915 = vpack.c.b16 %v893, %v891
    %v916 = vpack.c.b16 %v896, %v894
    %v917 = vpack.c.b16 %v897, %v895
    %v918 = vpack.c.b16 %v900, %v898
    %v919 = vpack.c.b16 %v901, %v899
    %v920 = vpack.c.b16 %v904, %v902
    %v921 = vpack.c.b16 %v905, %v903
    %938 = vmatpush.bf16.msra.mxu0 %v920
    %939 = vmatpush.bf16.msra.mxu0 %v918
    %940 = vmatpush.bf16.msra.mxu0 %v916
    %941 = vmatpush.bf16.msra.mxu0 %v914
    %942 = vmatpush.bf16.msra.mxu0 %v912
    %943 = vmatpush.bf16.msra.mxu0 %v910
    %944 = vmatpush.bf16.msra.mxu0 %v908
    %945 = vmatpush.bf16.msra.mxu0 %v906
    %946 = vmatmul.bf16.gmra.mxu0 %v842
    %v947 = vpop.f32.mrf.mxu0
    %v948 = vadd.f32 0.0, %v947
    %v949 = vpop.f32.mrf.mxu0
    %v950 = vadd.f32 0.0, %v949
    %951 = vmatmul.bf16.gmra.mxu0 %v843
    %v952 = vpop.f32.mrf.mxu0
    %v953 = vadd.f32 0.0, %v952
    %v954 = vpop.f32.mrf.mxu0
    %v955 = vadd.f32 0.0, %v954
    %956 = vmatmul.bf16.gmra.mxu0 %v844
    %v957 = vpop.f32.mrf.mxu0
    %v958 = vadd.f32 0.0, %v957
    %v959 = vpop.f32.mrf.mxu0
    %v960 = vadd.f32 0.0, %v959
    %961 = vmatmul.bf16.gmra.mxu0 %v845
    %v962 = vpop.f32.mrf.mxu0
    %v963 = vadd.f32 0.0, %v962
    %v964 = vpop.f32.mrf.mxu0
    %v965 = vadd.f32 0.0, %v964
    %966 = vmatmul.bf16.gmra.mxu0 %v846
    %v967 = vpop.f32.mrf.mxu0
    %v968 = vadd.f32 0.0, %v967
    %v969 = vpop.f32.mrf.mxu0
    %v970 = vadd.f32 0.0, %v969
    %971 = vmatmul.bf16.gmra.mxu0 %v847
    %v972 = vpop.f32.mrf.mxu0
    %v973 = vadd.f32 0.0, %v972
    %v974 = vpop.f32.mrf.mxu0
    %v975 = vadd.f32 0.0, %v974
    %976 = vmatmul.bf16.gmra.mxu0 %v848
    %v977 = vpop.f32.mrf.mxu0
    %v978 = vadd.f32 0.0, %v977
    %v979 = vpop.f32.mrf.mxu0
    %v980 = vadd.f32 0.0, %v979
    %981 = vmatmul.bf16.gmra.mxu0 %v849
    %v982 = vpop.f32.mrf.mxu0
    %v983 = vadd.f32 0.0, %v982
    %v984 = vpop.f32.mrf.mxu0
    %v985 = vadd.f32 0.0, %v984
    %986 = vdwg.mxu0
    %987 = vmatpush.bf16.msra.mxu0 %v921
    %988 = vmatpush.bf16.msra.mxu0 %v919
    %989 = vmatpush.bf16.msra.mxu0 %v917
    %990 = vmatpush.bf16.msra.mxu0 %v915
    %991 = vmatpush.bf16.msra.mxu0 %v913
    %992 = vmatpush.bf16.msra.mxu0 %v911
    %993 = vmatpush.bf16.msra.mxu0 %v909
    %994 = vmatpush.bf16.msra.mxu0 %v907
    %995 = vmatmul.bf16.gmra.mxu0 %v842
    %v996 = vpop.f32.mrf.mxu0
    %v997 = vadd.f32 0.0, %v996
    %v998 = vpop.f32.mrf.mxu0
    %v999 = vadd.f32 0.0, %v998
    %1000 = vmatmul.bf16.gmra.mxu0 %v843
    %v1001 = vpop.f32.mrf.mxu0
    %v1002 = vpop.f32.mrf.mxu0
    %1003 = vmatmul.bf16.gmra.mxu0 %v844
    %v1004 = vpop.f32.mrf.mxu0
    %v1005 = vpop.f32.mrf.mxu0
    %1006 = vmatmul.bf16.gmra.mxu0 %v845
    %v1007 = vpop.f32.mrf.mxu0
    %v1008 = vpop.f32.mrf.mxu0
    %1009 = vmatmul.bf16.gmra.mxu0 %v846
    %v1010 = vpop.f32.mrf.mxu0
    %v1011 = vpop.f32.mrf.mxu0
    %1012 = vmatmul.bf16.gmra.mxu0 %v847
    %v1013 = vpop.f32.mrf.mxu0
    %v1014 = vpop.f32.mrf.mxu0
    %1015 = vmatmul.bf16.gmra.mxu0 %v848
    %v1016 = vpop.f32.mrf.mxu0
    %v1017 = vpop.f32.mrf.mxu0
    %1018 = vmatmul.bf16.gmra.mxu0 %v849
    %v1019 = vpop.f32.mrf.mxu0
    %v1020 = vpop.f32.mrf.mxu0
    %1021 = vdwg.mxu0
    %v1022 = vld [vmem:[%s10] sm:$0x1]
    %v1024 = vperm.slane %v1022, 0
    %v1026 = vadd.f32 %v948, %v1024
    %v1027 = vadd.f32 %v950, %v1024
    %v1028 = vadd.f32 %v953, %v1024
    %v1029 = vadd.f32 %v955, %v1024
    %v1030 = vadd.f32 %v958, %v1024
    %v1031 = vadd.f32 %v960, %v1024
    %v1032 = vadd.f32 %v963, %v1024
    %v1033 = vadd.f32 %v965, %v1024
    %v1034 = vadd.f32 %v968, %v1024
    %v1035 = vadd.f32 %v970, %v1024
    %v1036 = vadd.f32 %v973, %v1024
    %v1037 = vadd.f32 %v975, %v1024
    %v1038 = vadd.f32 %v978, %v1024
    %v1039 = vadd.f32 %v980, %v1024
    %v1040 = vadd.f32 %v983, %v1024
    %v1041 = vadd.f32 %v985, %v1024
    %v1042 = vmax.f32 %v1026, 0.0
    %v1043 = vmax.f32 %v1027, 0.0
    %v1044 = vmax.f32 %v1028, 0.0
    %v1045 = vmax.f32 %v1029, 0.0
    %v1046 = vmax.f32 %v1030, 0.0
    %v1047 = vmax.f32 %v1031, 0.0
    %v1048 = vmax.f32 %v1032, 0.0
    %v1049 = vmax.f32 %v1033, 0.0
    %v1050 = vmax.f32 %v1034, 0.0
    %v1051 = vmax.f32 %v1035, 0.0
    %v1052 = vmax.f32 %v1036, 0.0
    %v1053 = vmax.f32 %v1037, 0.0
    %v1054 = vmax.f32 %v1038, 0.0
    %v1055 = vmax.f32 %v1039, 0.0
    %v1056 = vmax.f32 %v1040, 0.0
    %v1057 = vmax.f32 %v1041, 0.0
    %v1058 = vld [vmem:[%s8] sm:$0xf]
    %v1059 = vld [vmem:[%s8 + $0x4] sm:$0xf]
    %v1060 = vpack.c.bf16 %v1043, %v1042
    %v1061 = vpack.c.bf16 %v1045, %v1044
    %v1062 = vpack.c.bf16 %v1047, %v1046
    %v1063 = vpack.c.bf16 %v1049, %v1048
    %v1064 = vpack.c.bf16 %v1051, %v1050
    %v1065 = vpack.c.bf16 %v1053, %v1052
    %v1066 = vpack.c.bf16 %v1055, %v1054
    %v1067 = vpack.c.bf16 %v1057, %v1056
    %v1070 = vunpack.c.l.b16 %v1058
    %v1071 = vunpack.c.l.b16 %v1059
    %v1072 = vpack.c.b16 %v1071, %v1070
    %1074 = vmatpush.bf16.msra.mxu0 %v1067
    %1075 = vmatpush.bf16.msra.mxu0 %v1066
    %1076 = vmatpush.bf16.msra.mxu0 %v1065
    %1077 = vmatpush.bf16.msra.mxu0 %v1064
    %1078 = vmatpush.bf16.msra.mxu0 %v1063
    %1079 = vmatpush.bf16.msra.mxu0 %v1062
    %1080 = vmatpush.bf16.msra.mxu0 %v1061
    %1081 = vmatpush.bf16.msra.mxu0 %v1060
    %1082 = vmatmul.bf16.gmra.mxu0 %v1072
    %v1083 = vpop.f32.mrf.mxu0
    %v1084 = vadd.f32 0.0, %v1083
    %v1085 = vpop.f32.mrf.mxu0
    %v1086 = vadd.f32 0.0, %v1085
    %1087 = vdwg.mxu0
    %v1088 = vunpack.c.l.bf16 %v1058
    %v1089 = vunpack.c.l.bf16 %v1059
    %1090 = vadd.xlane.f32.xlu0 %v1088
    %v1091 = vpop.xlane.xlu0 %1090
    %1092 = vadd.xlane.f32.xlu0 %v1089
    %v1093 = vpop.xlane.xlu0 %1092
    %v1094 = vmax.f32 %v1091, 1.0
    %v1095 = vmax.f32 %v1093, 1.0
    %v1096 = vrcp.pop %v1094
    %v1097 = vrcp.pop %v1095
    %v1098 = vmul.f32 %v1084, %v1096
    %v1099 = vmul.f32 %v1086, %v1097
    %v1100 = vpack.c.bf16 %v1099, %v1098
    %v1101 = vld [vmem:[%s11] sm:$0xf]
    %v1102 = vld [vmem:[%s11 + $0x4] sm:$0xf]
    %v1103 = vld [vmem:[%s11 + $0x8] sm:$0xf]
    %v1104 = vld [vmem:[%s11 + $0xc] sm:$0xf]
    %v1105 = vld [vmem:[%s11 + $0x10] sm:$0xf]
    %v1106 = vld [vmem:[%s11 + $0x14] sm:$0xf]
    %v1107 = vld [vmem:[%s11 + $0x18] sm:$0xf]
    %v1108 = vld [vmem:[%s11 + $0x1c] sm:$0xf]
    %v1109 = vld [vmem:[%s11 + $0x20] sm:$0xf]
    %v1110 = vld [vmem:[%s11 + $0x24] sm:$0xf]
    %v1111 = vld [vmem:[%s11 + $0x28] sm:$0xf]
    %v1112 = vld [vmem:[%s11 + $0x2c] sm:$0xf]
    %v1113 = vld [vmem:[%s11 + $0x30] sm:$0xf]
    %v1114 = vld [vmem:[%s11 + $0x34] sm:$0xf]
    %v1115 = vld [vmem:[%s11 + $0x38] sm:$0xf]
    %v1116 = vld [vmem:[%s11 + $0x3c] sm:$0xf]
    %v1133 = vunpack.c.l.b16 %v1101
    %v1134 = vunpack.c.l.b16 %v1102
    %v1135 = vunpack.c.l.b16 %v1103
    %v1136 = vunpack.c.l.b16 %v1104
    %v1137 = vunpack.c.l.b16 %v1105
    %v1138 = vunpack.c.l.b16 %v1106
    %v1139 = vunpack.c.l.b16 %v1107
    %v1140 = vunpack.c.l.b16 %v1108
    %v1141 = vunpack.c.l.b16 %v1109
    %v1142 = vunpack.c.l.b16 %v1110
    %v1143 = vunpack.c.l.b16 %v1111
    %v1144 = vunpack.c.l.b16 %v1112
    %v1145 = vunpack.c.l.b16 %v1113
    %v1146 = vunpack.c.l.b16 %v1114
    %v1147 = vunpack.c.l.b16 %v1115
    %v1148 = vunpack.c.l.b16 %v1116
    %v1149 = vpack.c.b16 %v1134, %v1133
    %v1150 = vpack.c.b16 %v1136, %v1135
    %v1151 = vpack.c.b16 %v1138, %v1137
    %v1152 = vpack.c.b16 %v1140, %v1139
    %v1153 = vpack.c.b16 %v1142, %v1141
    %v1154 = vpack.c.b16 %v1144, %v1143
    %v1155 = vpack.c.b16 %v1146, %v1145
    %v1156 = vpack.c.b16 %v1148, %v1147
    %1165 = vmatpush.bf16.msra.mxu0 %v1156
    %1166 = vmatpush.bf16.msra.mxu0 %v1155
    %1167 = vmatpush.bf16.msra.mxu0 %v1154
    %1168 = vmatpush.bf16.msra.mxu0 %v1153
    %1169 = vmatpush.bf16.msra.mxu0 %v1152
    %1170 = vmatpush.bf16.msra.mxu0 %v1151
    %1171 = vmatpush.bf16.msra.mxu0 %v1150
    %1172 = vmatpush.bf16.msra.mxu0 %v1149
    %1173 = vmatmul.bf16.gmra.mxu0 %v1100
    %v1174 = vpop.f32.mrf.mxu0
    %v1175 = vadd.f32 %v997, %v1174
    %v1176 = vpop.f32.mrf.mxu0
    %v1177 = vadd.f32 %v999, %v1176
    %1178 = vdwg.mxu0
    %v1179 = vld [vmem:[%s12] sm:$0x1]
    %v1181 = vperm.slane %v1179, 0
    %v1183 = vadd.f32 %v1175, %v1181
    %v1184 = vadd.f32 %v1177, %v1181
    %v1185 = vmax.f32 %v1183, 0.0
    %v1186 = vmax.f32 %v1184, 0.0
    %v1187 = vmul.f32 %v1185, %v1185
    %v1188 = vmul.f32 %v1186, %v1186
    %1189 = vadd.xlane.f32.xlu0 %v1187
    %v1190 = vpop.xlane.xlu0 %1189
    %1191 = vadd.xlane.f32.xlu0 %v1188
    %v1192 = vpop.xlane.xlu0 %1191
    %vm1193 = vcmp.eq.f32.partialorder %v1190, 0.0
    %vm1194 = vcmp.eq.f32.partialorder %v1192, 0.0
    %v1195 = vrsqrt.pop %v1190
    %v1196 = vmul.f32 %v1195, %v1190
    %v1197 = vmul.f32 %v1196, %v1195
    %v1198 = vmul.f32 0.5, %v1197
    %v1199 = vsub.f32 1.5, %v1198
    %v1200 = vmul.f32 %v1195, %v1199
    %vm1201 = vweird.f32 %v1190
    %vm1202 = vweird.f32 %v1195
    %vm1203 = vmor %vm1201, %vm1202
    %v1204 = vsel %vm1203, %v1195, %v1200
    %v1205 = vrsqrt.pop %v1192
    %v1206 = vmul.f32 %v1205, %v1192
    %v1207 = vmul.f32 %v1206, %v1205
    %v1208 = vmul.f32 0.5, %v1207
    %v1209 = vsub.f32 1.5, %v1208
    %v1210 = vmul.f32 %v1205, %v1209
    %vm1211 = vweird.f32 %v1192
    %vm1212 = vweird.f32 %v1205
    %vm1213 = vmor %vm1211, %vm1212
    %v1214 = vsel %vm1213, %v1205, %v1210
    %v1215 = vsel %vm1193, 1.0, %v1204
    %v1216 = vsel %vm1194, 1.0, %v1214
    %v1217 = vmul.f32 %v1185, %v1215
    %v1218 = vmul.f32 %v1186, %v1216
    %v1219 = vld [vmem:[#allocation3] sm:$0xff]
    %v1220 = vld [vmem:[#allocation3 + $0x8] sm:$0xff]
    %v1221 = vadd.f32 %v1217, %v1219
    %v1222 = vadd.f32 %v1218, %v1220
    %1223 = vst [vmem:[#allocation4] sm:$0xff] %v1221
    %1224 = vst [vmem:[#allocation4 + $0x8] sm:$0xff] %v1222
    // Predicated region
    $region54: #{pinsage_forward.1} parent=1 // pred_check
      _
    $region55: #{pinsage_forward.1} parent=1 // pred_check_branch
      %1226 = sbr.rel (0) target = $region57
    $region56: #{pinsage_forward.1} parent=1 // pred_region
      %1228 = vsyncadd [#allocation5], 0
      %s1229 = sshll.u32 [#allocation4], 4
      %s1230 = int_to_ptr.vmem [resolvable:$true] %s1229
      %s1231 = sshll.u32 %s13, 4
      %s1232 = int_to_ptr.hbm [resolvable:$true] %s1231
      %1237 = dma.vmem_to_hbm [thread:$0]  %s1230, 256, %s1232, [#allocation5], 128, 128, 8
    $region57: #{pinsage_forward.1} parent=1 // pred_fallthru
      _
    // Predicated region
    $region58: #{pinsage_forward.1} parent=1 // pred_check
      _
    $region59: #{pinsage_forward.1} parent=1 // pred_check_branch
      %1239 = sbr.rel (0) target = $region61
    $region60: #{pinsage_forward.1} parent=1 // pred_region
      %1241 = dma.done [#allocation5], 256
    $region61: #{pinsage_forward.1} parent=1 // pred_fallthru
      _
    %1242 = vsyncpa [#allocation5], 1

</llo_original>
